<compile_context>
chip_gen: v7x
topology: tpu7x:2x2x1
jax: 0.10.0
libtpu: 0.0.40
codegen_flags: <defaults>
</compile_context>

<pallas_src>
import jax
import jax.numpy as jnp
from jax.experimental import pallas as pl
from jax.experimental.pallas import tpu as pltpu


def mouse_rnn_kernel(x_ref, wih_ref, whh_ref, b_ref, wfc_ref, bfc_ref, out_ref):
    """Single-invocation kernel: whole sequence in VMEM.

    x_ref   : (T*B, I)  time-major flattened input
    wih_ref : (I, H)    input->hidden weight (pre-transposed)
    whh_ref : (H, H)    hidden->hidden weight (pre-transposed)
    b_ref   : (1, H)    pre-summed bias (b_ih + b_hh)
    wfc_ref : (H, O)    fc weight (pre-transposed)
    bfc_ref : (1, O)    fc bias
    out_ref : (B, O)    output
    """
    TB, _ = x_ref.shape
    H = whh_ref.shape[0]
    B = out_ref.shape[0]
    T = TB // B  # static

    # ---- Phase 1: hoisted input projection for ALL timesteps: one MXU matmul.
    # P[t*B + b, :] = x[t, b, :] @ W_ih^T + (b_ih + b_hh)
    p = (
        jnp.dot(x_ref[...], wih_ref[...], preferred_element_type=jnp.float32)
        + b_ref[...]
    )

    # ---- Phase 2: sequential recurrence, statically unrolled (T is tiny and
    # compile-time constant; static slices of the register-resident P).
    # h_t = tanh(P[t] + h_{t-1} @ W_hh^T), h_0 = 0 (matches torch.zeros h0).
    whh = whh_ref[...]
    h = jnp.zeros((B, H), jnp.float32)
    for t in range(T):
        h = jnp.tanh(
            p[t * B:(t + 1) * B, :]
            + jnp.dot(h, whh, preferred_element_type=jnp.float32)
        )

    # ---- Phase 3: final Linear on the last hidden state.
    out_ref[...] = (
        jnp.dot(h, wfc_ref[...], preferred_element_type=jnp.float32)
        + bfc_ref[...]
    ).astype(out_ref.dtype)


def mouse_rnn_forward(x, params):
    """x: (B, T, input_size) batch-first, like the PyTorch module."""
    B, T, I = x.shape
    H = params["w_hh"].shape[0]
    O = params["w_fc"].shape[0]

    wih_t = params["w_ih"].T.astype(jnp.float32)                         # (I, H)
    whh_t = params["w_hh"].T.astype(jnp.float32)                         # (H, H)
    b = (params["b_ih"] + params["b_hh"])[None, :].astype(jnp.float32)   # (1, H)
    wfc_t = params["w_fc"].T.astype(jnp.float32)                         # (H, O)
    bfc = params["b_fc"][None, :].astype(jnp.float32)                    # (1, O)

    # Layout plumbing in the wrapper (free in XLA), not in the kernel:
    # (B, T, I) -> time-major (T, B, I) -> flat (T*B, I).
    x_flat = jnp.transpose(x, (1, 0, 2)).reshape(T * B, I).astype(jnp.float32)

    out = pl.pallas_call(
        mouse_rnn_kernel,
        out_shape=jax.ShapeDtypeStruct((B, O), x.dtype),
        grid_spec=pltpu.PrefetchScalarGridSpec(
            num_scalar_prefetch=0,
            grid=(1,),                                        # single invocation
            in_specs=[
                pl.BlockSpec((T * B, I), lambda i: (0, 0)),   # flattened sequence
                pl.BlockSpec((I, H), lambda i: (0, 0)),       # W_ih^T
                pl.BlockSpec((H, H), lambda i: (0, 0)),       # W_hh^T
                pl.BlockSpec((1, H), lambda i: (0, 0)),       # b_ih + b_hh
                pl.BlockSpec((H, O), lambda i: (0, 0)),       # W_fc^T
                pl.BlockSpec((1, O), lambda i: (0, 0)),       # b_fc
            ],
            out_specs=pl.BlockSpec((B, O), lambda i: (0, 0)),
        ),
        compiler_params=pltpu.CompilerParams(
            dimension_semantics=("arbitrary",),
        ),
    )(x_flat, wih_t, whh_t, b, wfc_t, bfc)
    return out


def mouse_rnn_reference(x, params):
    """Pure-JAX reference matching torch semantics (sanity check)."""
    B, T, I = x.shape
    H = params["w_hh"].shape[0]
    h = jnp.zeros((B, H), jnp.float32)

    def step(h, x_t):
        h_new = jnp.tanh(x_t @ params["w_ih"].T + params["b_ih"]
                         + h @ params["w_hh"].T + params["b_hh"])
        return h_new, None

    h_last, _ = jax.lax.scan(step, h, jnp.transpose(x, (1, 0, 2)))
    return h_last @ params["w_fc"].T + params["b_fc"]


def init_params(key, input_size, hidden_size, output_size):
    # Deterministic uniform(-1/sqrt(H), 1/sqrt(H)) init, like nn.RNN / nn.Linear.
    ks = jax.random.split(key, 6)
    bound = 1.0 / jnp.sqrt(jnp.float32(hidden_size))
    u = lambda k, shape: jax.random.uniform(k, shape, jnp.float32, -bound, bound)
    return {
        "w_ih": u(ks[0], (hidden_size, input_size)),
        "w_hh": u(ks[1], (hidden_size, hidden_size)),
        "b_ih": u(ks[2], (hidden_size,)),
        "b_hh": u(ks[3], (hidden_size,)),
        "w_fc": u(ks[4], (output_size, hidden_size)),
        "b_fc": u(ks[5], (output_size,)),
    }


if __name__ == "__main__":
    B, T, INPUT, HIDDEN, OUTPUT = 2, 8, 16, 32, 8

    key = jax.random.PRNGKey(0)
    kx, kp = jax.random.split(key)
    x = jax.random.normal(kx, (B, T, INPUT), jnp.float32)
    params = init_params(kp, INPUT, HIDDEN, OUTPUT)

    out = mouse_rnn_forward(x, params)
    out = jax.block_until_ready(out)

    ref = mouse_rnn_reference(x, params)
    assert out.shape == (B, OUTPUT)
    assert jnp.allclose(out, ref, atol=1e-4, rtol=1e-4)

    print("KERNEL_OK")
</pallas_src>

<mosaic_0001>
module attributes {stable_mosaic.version = 11 : i64} {
  func.func @mouse_rnn_kernel(%arg0: i32, %arg1: memref<16x16xf32, #tpu.memory_space<vmem>>, %arg2: memref<16x32xf32, #tpu.memory_space<vmem>>, %arg3: memref<32x32xf32, #tpu.memory_space<vmem>>, %arg4: memref<1x32xf32, #tpu.memory_space<vmem>>, %arg5: memref<32x8xf32, #tpu.memory_space<vmem>>, %arg6: memref<1x8xf32, #tpu.memory_space<vmem>>, %arg7: memref<2x8xf32, #tpu.memory_space<vmem>>) attributes {dimension_semantics = [#tpu.dimension_semantics<arbitrary>], iteration_bounds = array<i64: 1>, scalar_prefetch = 0 : i64, scratch_operands = 0 : i64, tpu.core_type = #tpu.core_type<tc>, window_params = [{pipeline_mode = #tpu.pipeline_mode<synchronous>, transform_indices = @transform_0, window_bounds = array<i64: 16, 16>}, {pipeline_mode = #tpu.pipeline_mode<synchronous>, transform_indices = @transform_1, window_bounds = array<i64: 16, 32>}, {pipeline_mode = #tpu.pipeline_mode<synchronous>, transform_indices = @transform_2, window_bounds = array<i64: 32, 32>}, {pipeline_mode = #tpu.pipeline_mode<synchronous>, transform_indices = @transform_3, window_bounds = array<i64: 1, 32>}, {pipeline_mode = #tpu.pipeline_mode<synchronous>, transform_indices = @transform_4, window_bounds = array<i64: 32, 8>}, {pipeline_mode = #tpu.pipeline_mode<synchronous>, transform_indices = @transform_5, window_bounds = array<i64: 1, 8>}, {pipeline_mode = #tpu.pipeline_mode<synchronous>, transform_indices = @transform_6, window_bounds = array<i64: 2, 8>}]} {
    %c0 = arith.constant 0 : index
    %c0_0 = arith.constant 0 : index
    %0 = vector.load %arg1[%c0, %c0_0] : memref<16x16xf32, #tpu.memory_space<vmem>>, vector<16x16xf32>
    %c0_1 = arith.constant 0 : index
    %c0_2 = arith.constant 0 : index
    %1 = vector.load %arg2[%c0_1, %c0_2] : memref<16x32xf32, #tpu.memory_space<vmem>>, vector<16x32xf32>
    %cst = arith.constant dense<0.000000e+00> : vector<16x32xf32>
    %2 = tpu.matmul %0, %1, %cst {dimension_numbers = #tpu.dot_dimension_numbers<[1], [0], [0], [1], [0, 0, 1, 1], [], []>} : vector<16x16xf32>, vector<16x32xf32>, vector<16x32xf32> -> vector<16x32xf32>
    %c0_3 = arith.constant 0 : index
    %c0_4 = arith.constant 0 : index
    %3 = vector.load %arg4[%c0_3, %c0_4] : memref<1x32xf32, #tpu.memory_space<vmem>>, vector<1x32xf32>
    %4 = vector.broadcast %3 : vector<1x32xf32> to vector<16x32xf32>
    %5 = arith.addf %2, %4 : vector<16x32xf32>
    %c0_5 = arith.constant 0 : index
    %c0_6 = arith.constant 0 : index
    %6 = vector.load %arg3[%c0_5, %c0_6] : memref<32x32xf32, #tpu.memory_space<vmem>>, vector<32x32xf32>
    %cst_7 = arith.constant 0.000000e+00 : f32
    %7 = vector.broadcast %cst_7 : f32 to vector<2x32xf32>
    %8 = vector.extract_strided_slice %5 {offsets = [0, 0], sizes = [2, 32], strides = [1, 1]} : vector<16x32xf32> to vector<2x32xf32>
    %cst_8 = arith.constant dense<0.000000e+00> : vector<2x32xf32>
    %9 = tpu.matmul %7, %6, %cst_8 {dimension_numbers = #tpu.dot_dimension_numbers<[1], [0], [0], [1], [0, 0, 1, 1], [], []>} : vector<2x32xf32>, vector<32x32xf32>, vector<2x32xf32> -> vector<2x32xf32>
    %10 = arith.addf %8, %9 : vector<2x32xf32>
    %11 = math.tanh %10 : vector<2x32xf32>
    %12 = vector.extract_strided_slice %5 {offsets = [2, 0], sizes = [2, 32], strides = [1, 1]} : vector<16x32xf32> to vector<2x32xf32>
    %cst_9 = arith.constant dense<0.000000e+00> : vector<2x32xf32>
    %13 = tpu.matmul %11, %6, %cst_9 {dimension_numbers = #tpu.dot_dimension_numbers<[1], [0], [0], [1], [0, 0, 1, 1], [], []>} : vector<2x32xf32>, vector<32x32xf32>, vector<2x32xf32> -> vector<2x32xf32>
    %14 = arith.addf %12, %13 : vector<2x32xf32>
    %15 = math.tanh %14 : vector<2x32xf32>
    %16 = vector.extract_strided_slice %5 {offsets = [4, 0], sizes = [2, 32], strides = [1, 1]} : vector<16x32xf32> to vector<2x32xf32>
    %cst_10 = arith.constant dense<0.000000e+00> : vector<2x32xf32>
    %17 = tpu.matmul %15, %6, %cst_10 {dimension_numbers = #tpu.dot_dimension_numbers<[1], [0], [0], [1], [0, 0, 1, 1], [], []>} : vector<2x32xf32>, vector<32x32xf32>, vector<2x32xf32> -> vector<2x32xf32>
    %18 = arith.addf %16, %17 : vector<2x32xf32>
    %19 = math.tanh %18 : vector<2x32xf32>
    %20 = vector.extract_strided_slice %5 {offsets = [6, 0], sizes = [2, 32], strides = [1, 1]} : vector<16x32xf32> to vector<2x32xf32>
    %cst_11 = arith.constant dense<0.000000e+00> : vector<2x32xf32>
    %21 = tpu.matmul %19, %6, %cst_11 {dimension_numbers = #tpu.dot_dimension_numbers<[1], [0], [0], [1], [0, 0, 1, 1], [], []>} : vector<2x32xf32>, vector<32x32xf32>, vector<2x32xf32> -> vector<2x32xf32>
    %22 = arith.addf %20, %21 : vector<2x32xf32>
    %23 = math.tanh %22 : vector<2x32xf32>
    %24 = vector.extract_strided_slice %5 {offsets = [8, 0], sizes = [2, 32], strides = [1, 1]} : vector<16x32xf32> to vector<2x32xf32>
    %cst_12 = arith.constant dense<0.000000e+00> : vector<2x32xf32>
    %25 = tpu.matmul %23, %6, %cst_12 {dimension_numbers = #tpu.dot_dimension_numbers<[1], [0], [0], [1], [0, 0, 1, 1], [], []>} : vector<2x32xf32>, vector<32x32xf32>, vector<2x32xf32> -> vector<2x32xf32>
    %26 = arith.addf %24, %25 : vector<2x32xf32>
    %27 = math.tanh %26 : vector<2x32xf32>
    %28 = vector.extract_strided_slice %5 {offsets = [10, 0], sizes = [2, 32], strides = [1, 1]} : vector<16x32xf32> to vector<2x32xf32>
    %cst_13 = arith.constant dense<0.000000e+00> : vector<2x32xf32>
    %29 = tpu.matmul %27, %6, %cst_13 {dimension_numbers = #tpu.dot_dimension_numbers<[1], [0], [0], [1], [0, 0, 1, 1], [], []>} : vector<2x32xf32>, vector<32x32xf32>, vector<2x32xf32> -> vector<2x32xf32>
    %30 = arith.addf %28, %29 : vector<2x32xf32>
    %31 = math.tanh %30 : vector<2x32xf32>
    %32 = vector.extract_strided_slice %5 {offsets = [12, 0], sizes = [2, 32], strides = [1, 1]} : vector<16x32xf32> to vector<2x32xf32>
    %cst_14 = arith.constant dense<0.000000e+00> : vector<2x32xf32>
    %33 = tpu.matmul %31, %6, %cst_14 {dimension_numbers = #tpu.dot_dimension_numbers<[1], [0], [0], [1], [0, 0, 1, 1], [], []>} : vector<2x32xf32>, vector<32x32xf32>, vector<2x32xf32> -> vector<2x32xf32>
    %34 = arith.addf %32, %33 : vector<2x32xf32>
    %35 = math.tanh %34 : vector<2x32xf32>
    %36 = vector.extract_strided_slice %5 {offsets = [14, 0], sizes = [2, 32], strides = [1, 1]} : vector<16x32xf32> to vector<2x32xf32>
    %cst_15 = arith.constant dense<0.000000e+00> : vector<2x32xf32>
    %37 = tpu.matmul %35, %6, %cst_15 {dimension_numbers = #tpu.dot_dimension_numbers<[1], [0], [0], [1], [0, 0, 1, 1], [], []>} : vector<2x32xf32>, vector<32x32xf32>, vector<2x32xf32> -> vector<2x32xf32>
    %38 = arith.addf %36, %37 : vector<2x32xf32>
    %39 = math.tanh %38 : vector<2x32xf32>
    %c0_16 = arith.constant 0 : index
    %c0_17 = arith.constant 0 : index
    %40 = vector.load %arg5[%c0_16, %c0_17] : memref<32x8xf32, #tpu.memory_space<vmem>>, vector<32x8xf32>
    %cst_18 = arith.constant dense<0.000000e+00> : vector<2x8xf32>
    %41 = tpu.matmul %39, %40, %cst_18 {dimension_numbers = #tpu.dot_dimension_numbers<[1], [0], [0], [1], [0, 0, 1, 1], [], []>} : vector<2x32xf32>, vector<32x8xf32>, vector<2x8xf32> -> vector<2x8xf32>
    %c0_19 = arith.constant 0 : index
    %c0_20 = arith.constant 0 : index
    %42 = vector.load %arg6[%c0_19, %c0_20] : memref<1x8xf32, #tpu.memory_space<vmem>>, vector<1x8xf32>
    %43 = vector.broadcast %42 : vector<1x8xf32> to vector<2x8xf32>
    %44 = arith.addf %41, %43 : vector<2x8xf32>
    %c0_21 = arith.constant 0 : index
    %c0_22 = arith.constant 0 : index
    %45 = vector.load %arg7[%c0_21, %c0_22] : memref<2x8xf32, #tpu.memory_space<vmem>>, vector<2x8xf32>
    tpu.vector_store %arg7[%c0_21, %c0_22], %44 {strides = array<i32>} : memref<2x8xf32, #tpu.memory_space<vmem>>, vector<2x8xf32>,
    return
  }
  func.func @transform_0(%arg0: i32) -> (i32, i32) {
    %c0_i32 = arith.constant 0 : i32
    %c0_i32_0 = arith.constant 0 : i32
    %c0_i32_1 = arith.constant 0 : i32
    return %c0_i32, %c0_i32_0 : i32, i32
  }
  func.func @transform_1(%arg0: i32) -> (i32, i32) {
    %c0_i32 = arith.constant 0 : i32
    %c0_i32_0 = arith.constant 0 : i32
    %c0_i32_1 = arith.constant 0 : i32
    return %c0_i32, %c0_i32_0 : i32, i32
  }
  func.func @transform_2(%arg0: i32) -> (i32, i32) {
    %c0_i32 = arith.constant 0 : i32
    %c0_i32_0 = arith.constant 0 : i32
    %c0_i32_1 = arith.constant 0 : i32
    return %c0_i32, %c0_i32_0 : i32, i32
  }
  func.func @transform_3(%arg0: i32) -> (i32, i32) {
    %c0_i32 = arith.constant 0 : i32
    %c0_i32_0 = arith.constant 0 : i32
    %c0_i32_1 = arith.constant 0 : i32
    return %c0_i32, %c0_i32_0 : i32, i32
  }
  func.func @transform_4(%arg0: i32) -> (i32, i32) {
    %c0_i32 = arith.constant 0 : i32
    %c0_i32_0 = arith.constant 0 : i32
    %c0_i32_1 = arith.constant 0 : i32
    return %c0_i32, %c0_i32_0 : i32, i32
  }
  func.func @transform_5(%arg0: i32) -> (i32, i32) {
    %c0_i32 = arith.constant 0 : i32
    %c0_i32_0 = arith.constant 0 : i32
    %c0_i32_1 = arith.constant 0 : i32
    return %c0_i32, %c0_i32_0 : i32, i32
  }
  func.func @transform_6(%arg0: i32) -> (i32, i32) {
    %c0_i32 = arith.constant 0 : i32
    %c0_i32_0 = arith.constant 0 : i32
    %c0_i32_1 = arith.constant 0 : i32
    return %c0_i32, %c0_i32_0 : i32, i32
  }
}

</mosaic_0001>

<llo_original>
// kernel: tpu_custom_call.1
$region0: #{tpu_custom_call.1}
  #allocation0 [shape = 'u32[]', space=smem, size = 0x4, offset = 0x4, fixed_abs, tag = 'smem constant byte address 0x4 - core index']
  #allocation1 [shape = 'u32[144,128]{1,0:T(1,128)}', space=vmem, size = 0x12000, scoped, tag = 'internal scratch']
  %s0 = inlined_call_operand.hbm [shape: f32[16,16], index: 0, kind: input, shape index: {}]
  %s1 = inlined_call_operand.hbm [shape: f32[16,32], index: 1, kind: input, shape index: {}]
  %s2 = inlined_call_operand.vmem [shape: f32[32,32], index: 2, kind: input, shape index: {}]
  %s3 = inlined_call_operand.vmem [shape: f32[1,32], index: 3, kind: input, shape index: {}]
  %s4 = inlined_call_operand.vmem [shape: f32[32,8], index: 4, kind: input, shape index: {}]
  %s5 = inlined_call_operand.vmem [shape: f32[1,8], index: 5, kind: input, shape index: {}]
  %s6 = inlined_call_operand.hbm [shape: f32[2,8], index: 6, kind: output, shape index: {}]
  %s7 = sld [smem:[#allocation0]]
  $region42: #{tpu_custom_call.1} parent=0
    _
  %s9 = ssub.s32 1, %s7
  %s10 = scalar_select 0, %s9, %s7
  $region1: #{tpu_custom_call.1} parent=0
    #allocation2 [shape = 'u8[8192]{0}', space=vmem, size = 0x2000, scoped, tag = 'input window, operand 0, single buffered']
    #allocation3 [shape = 's32[1]{0}', space=sflag, size = 0x4, scoped, tag = 'scoped memory for tpu_custom_call.1']
    #allocation4 [shape = 's32[1]{0}', space=sflag, size = 0x4, scoped, tag = 'scoped memory for tpu_custom_call.1']
    #allocation5 [shape = 'u8[8192]{0}', space=vmem, size = 0x2000, scoped, tag = 'input window, operand 1, single buffered']
    #allocation6 [shape = 's32[1]{0}', space=sflag, size = 0x4, scoped, tag = 'scoped memory for tpu_custom_call.1']
    #allocation7 [shape = 'u8[1024]{0}', space=vmem, size = 0x400, scoped, tag = 'output window, operand 0, single buffered']
    %11 = vsyncpa [#allocation3], 0
    %12 = vsyncpa [#allocation6], 0
    %13 = vsyncpa [#allocation4], 0
    // Predicated region
    $region2: #{tpu_custom_call.1} parent=1 // pred_check
      _
    $region3: #{tpu_custom_call.1} parent=1 // pred_check_branch
      %15 = sbr.rel (0) target = $region5
    $region4: #{tpu_custom_call.1} parent=1 // pred_region
      %s17 = ssub.s32 256, 256
      %18 = vsyncadd [#allocation3], %s17
      %s19 = sshll.u32 [#allocation2], 4
      %s20 = int_to_ptr.vmem [resolvable:$true] %s19
      %25 = dma.hbm_to_vmem [thread:$0]  %s0, 256, %s20, [#allocation3], 128, 128, 8
    $region5: #{tpu_custom_call.1} parent=1 // pred_fallthru
      _
    // Predicated region
    $region6: #{tpu_custom_call.1} parent=1 // pred_check
      _
    $region7: #{tpu_custom_call.1} parent=1 // pred_check_branch
      %27 = sbr.rel (0) target = $region9
    $region8: #{tpu_custom_call.1} parent=1 // pred_region
      %s29 = ssub.s32 256, 256
      %30 = vsyncadd [#allocation6], %s29
      %s31 = sshll.u32 [#allocation5], 4
      %s32 = int_to_ptr.vmem [resolvable:$true] %s31
      %37 = dma.hbm_to_vmem [thread:$0]  %s1, 256, %s32, [#allocation6], 128, 128, 8
    $region9: #{tpu_custom_call.1} parent=1 // pred_fallthru
      _
    // Predicated region
    $region10: #{tpu_custom_call.1} parent=1 // pred_check
      _
    $region11: #{tpu_custom_call.1} parent=1 // pred_check_branch
      %39 = sbr.rel (0) target = $region13
    $region12: #{tpu_custom_call.1} parent=1 // pred_region
      _
    $region13: #{tpu_custom_call.1} parent=1 // pred_fallthru
      _
    // Predicated region
    $region14: #{tpu_custom_call.1} parent=1 // pred_check
      _
    $region15: #{tpu_custom_call.1} parent=1 // pred_check_branch
      %41 = sbr.rel (0) target = $region17
    $region16: #{tpu_custom_call.1} parent=1 // pred_region
      _
    $region17: #{tpu_custom_call.1} parent=1 // pred_fallthru
      _
    // Predicated region
    $region18: #{tpu_custom_call.1} parent=1 // pred_check
      _
    $region19: #{tpu_custom_call.1} parent=1 // pred_check_branch
      %43 = sbr.rel (0) target = $region21
    $region20: #{tpu_custom_call.1} parent=1 // pred_region
      _
    $region21: #{tpu_custom_call.1} parent=1 // pred_fallthru
      _
    // Predicated region
    $region22: #{tpu_custom_call.1} parent=1 // pred_check
      _
    $region23: #{tpu_custom_call.1} parent=1 // pred_check_branch
      %45 = sbr.rel (0) target = $region25
    $region24: #{tpu_custom_call.1} parent=1 // pred_region
      _
    $region25: #{tpu_custom_call.1} parent=1 // pred_fallthru
      _
    // Predicated region
    $region26: #{tpu_custom_call.1} parent=1 // pred_check
      _
    $region27: #{tpu_custom_call.1} parent=1 // pred_check_branch
      %47 = sbr.rel (0) target = $region29
    $region28: #{tpu_custom_call.1} parent=1 // pred_region
      %48 = dma.done [#allocation3], 256
    $region29: #{tpu_custom_call.1} parent=1 // pred_fallthru
      _
    // Predicated region
    $region30: #{tpu_custom_call.1} parent=1 // pred_check
      _
    $region31: #{tpu_custom_call.1} parent=1 // pred_check_branch
      %50 = sbr.rel (0) target = $region33
    $region32: #{tpu_custom_call.1} parent=1 // pred_region
      %51 = dma.done [#allocation6], 256
    $region33: #{tpu_custom_call.1} parent=1 // pred_fallthru
      _
    %v52 = vld [vmem:[#allocation2] sm:$0xff]
    %v53 = vld [vmem:[#allocation2 + $0x8] sm:$0xff]
    %v54 = vld [vmem:[#allocation5] sm:$0xff]
    %v55 = vld [vmem:[#allocation5 + $0x8] sm:$0xff]
    %v56 = vld [vmem:[%s3] sm:$0x1]
    %v58 = vlaneseq
    %v59 = vshrl.u32 %v58, 7
    %v60 = vsub.s32 0, %v59
    %v61 = vrot.slane %v56, %v60
    %vm63 = vcmask 130048
    %v65 = vsel %vm63, %v52, 0
    %v68 = vsel %vm63, %v53, 0
    %70 = vmatprep.subr.mxu0 0.0
    %71 = vmatpush1.msra.mxu0 %v54
    %72 = vmatprep.subr.mxu0 0.0
    %73 = vmatpush1.msra.mxu0 %v55
    %74 = vmatprep.subr.mxu0 0.0
    %75 = vmatpush1.msra.mxu0 0.0
    %76 = vmatprep.subr.mxu0 0.0
    %77 = vmatpush1.msra.mxu0 0.0
    %78 = vmatprep.subr.mxu0 0.0
    %79 = vmatpush1.msra.mxu0 0.0
    %80 = vmatprep.subr.mxu0 0.0
    %81 = vmatpush1.msra.mxu0 0.0
    %82 = vmatprep.subr.mxu0 0.0
    %83 = vmatpush1.msra.mxu0 0.0
    %84 = vmatprep.subr.mxu0 0.0
    %85 = vmatpush1.msra.mxu0 0.0
    %86 = vmatprep.subr.mxu0 0.0
    %87 = vmatpush1.msra.mxu0 0.0
    %88 = vmatprep.subr.mxu0 0.0
    %89 = vmatpush1.msra.mxu0 0.0
    %90 = vmatprep.subr.mxu0 0.0
    %91 = vmatpush1.msra.mxu0 0.0
    %92 = vmatprep.subr.mxu0 0.0
    %93 = vmatpush1.msra.mxu0 0.0
    %94 = vmatprep.subr.mxu0 0.0
    %95 = vmatpush1.msra.mxu0 0.0
    %96 = vmatprep.subr.mxu0 0.0
    %97 = vmatpush1.msra.mxu0 0.0
    %98 = vmatprep.subr.mxu0 0.0
    %99 = vmatpush1.msra.mxu0 0.0
    %100 = vmatprep.subr.mxu0 0.0
    %101 = vmatpush1.msra.mxu0 0.0
    %102 = vmatprep.subr.mxu0 0.0
    %103 = vmatpush1.msra.mxu0 0.0
    %104 = vmatprep.subr.mxu0 0.0
    %105 = vmatpush1.msra.mxu0 0.0
    %106 = vmatprep.subr.mxu0 0.0
    %107 = vmatpush1.msra.mxu0 0.0
    %108 = vmatprep.subr.mxu0 0.0
    %109 = vmatpush1.msra.mxu0 0.0
    %110 = vmatprep.subr.mxu0 0.0
    %111 = vmatpush1.msra.mxu0 0.0
    %112 = vmatprep.subr.mxu0 0.0
    %113 = vmatpush1.msra.mxu0 0.0
    %114 = vmatprep.subr.mxu0 0.0
    %115 = vmatpush1.msra.mxu0 0.0
    %116 = vmatprep.subr.mxu0 0.0
    %117 = vmatpush1.msra.mxu0 0.0
    %118 = vmatprep.subr.mxu0 0.0
    %119 = vmatpush1.msra.mxu0 0.0
    %120 = vmatprep.subr.mxu0 0.0
    %121 = vmatpush1.msra.mxu0 0.0
    %122 = vmatprep.subr.mxu0 0.0
    %123 = vmatpush1.msra.mxu0 0.0
    %124 = vmatprep.subr.mxu0 0.0
    %125 = vmatpush1.msra.mxu0 0.0
    %126 = vmatprep.subr.mxu0 0.0
    %127 = vmatpush1.msra.mxu0 0.0
    %128 = vmatprep.subr.mxu0 0.0
    %129 = vmatpush1.msra.mxu0 0.0
    %130 = vmatprep.subr.mxu0 0.0
    %131 = vmatpush1.msra.mxu0 0.0
    %132 = vmatprep.subr.mxu0 0.0
    %133 = vmatpush1.msra.mxu0 0.0
    %134 = vmatprep.mubr.f32.mxu0 0.0
    %135 = vmatmul.mubr.f32.gmra.mrb[0].mxu0 %v65
    %v136 = vpop.f32.mrb[0].mxu0
    %v137 = vadd.f32 %v61, %v136
    %v138 = vpop.f32.mrb[0].mxu0
    %139 = vmatprep.mubr.f32.mxu0 0.0
    %140 = vmatmul.mubr.f32.gmra.mrb[0].mxu0 %v68
    %v141 = vpop.f32.mrb[0].mxu0
    %v142 = vadd.f32 %v61, %v141
    %v143 = vpop.f32.mrb[0].mxu0
    %144 = vdwg.mxu0
    %v145 = vld [vmem:[%s2] sm:$0xff]
    %v146 = vld [vmem:[%s2 + $0x8] sm:$0xff]
    %v147 = vld [vmem:[%s2 + $0x10] sm:$0xff]
    %v148 = vld [vmem:[%s2 + $0x18] sm:$0xff]
    %vm149 = vcmask 261120
    %v151 = vsel %vm149, 0.0, 0
    %153 = vmatprep.subr.mxu0 0.0
    %154 = vmatpush1.msra.mxu0 %v145
    %155 = vmatprep.subr.mxu0 0.0
    %156 = vmatpush1.msra.mxu0 %v146
    %157 = vmatprep.subr.mxu0 0.0
    %158 = vmatpush1.msra.mxu0 %v147
    %159 = vmatprep.subr.mxu0 0.0
    %160 = vmatpush1.msra.mxu0 %v148
    %161 = vmatprep.subr.mxu0 0.0
    %162 = vmatpush1.msra.mxu0 0.0
    %163 = vmatprep.subr.mxu0 0.0
    %164 = vmatpush1.msra.mxu0 0.0
    %165 = vmatprep.subr.mxu0 0.0
    %166 = vmatpush1.msra.mxu0 0.0
    %167 = vmatprep.subr.mxu0 0.0
    %168 = vmatpush1.msra.mxu0 0.0
    %169 = vmatprep.subr.mxu0 0.0
    %170 = vmatpush1.msra.mxu0 0.0
    %171 = vmatprep.subr.mxu0 0.0
    %172 = vmatpush1.msra.mxu0 0.0
    %173 = vmatprep.subr.mxu0 0.0
    %174 = vmatpush1.msra.mxu0 0.0
    %175 = vmatprep.subr.mxu0 0.0
    %176 = vmatpush1.msra.mxu0 0.0
    %177 = vmatprep.subr.mxu0 0.0
    %178 = vmatpush1.msra.mxu0 0.0
    %179 = vmatprep.subr.mxu0 0.0
    %180 = vmatpush1.msra.mxu0 0.0
    %181 = vmatprep.subr.mxu0 0.0
    %182 = vmatpush1.msra.mxu0 0.0
    %183 = vmatprep.subr.mxu0 0.0
    %184 = vmatpush1.msra.mxu0 0.0
    %185 = vmatprep.subr.mxu0 0.0
    %186 = vmatpush1.msra.mxu0 0.0
    %187 = vmatprep.subr.mxu0 0.0
    %188 = vmatpush1.msra.mxu0 0.0
    %189 = vmatprep.subr.mxu0 0.0
    %190 = vmatpush1.msra.mxu0 0.0
    %191 = vmatprep.subr.mxu0 0.0
    %192 = vmatpush1.msra.mxu0 0.0
    %193 = vmatprep.subr.mxu0 0.0
    %194 = vmatpush1.msra.mxu0 0.0
    %195 = vmatprep.subr.mxu0 0.0
    %196 = vmatpush1.msra.mxu0 0.0
    %197 = vmatprep.subr.mxu0 0.0
    %198 = vmatpush1.msra.mxu0 0.0
    %199 = vmatprep.subr.mxu0 0.0
    %200 = vmatpush1.msra.mxu0 0.0
    %201 = vmatprep.subr.mxu0 0.0
    %202 = vmatpush1.msra.mxu0 0.0
    %203 = vmatprep.subr.mxu0 0.0
    %204 = vmatpush1.msra.mxu0 0.0
    %205 = vmatprep.subr.mxu0 0.0
    %206 = vmatpush1.msra.mxu0 0.0
    %207 = vmatprep.subr.mxu0 0.0
    %208 = vmatpush1.msra.mxu0 0.0
    %209 = vmatprep.subr.mxu0 0.0
    %210 = vmatpush1.msra.mxu0 0.0
    %211 = vmatprep.subr.mxu0 0.0
    %212 = vmatpush1.msra.mxu0 0.0
    %213 = vmatprep.subr.mxu0 0.0
    %214 = vmatpush1.msra.mxu0 0.0
    %215 = vmatprep.subr.mxu0 0.0
    %216 = vmatpush1.msra.mxu0 0.0
    %217 = vmatprep.mubr.f32.mxu0 0.0
    %218 = vmatmul.mubr.f32.gmra.mrb[0].mxu0 %v151
    %v219 = vpop.f32.mrb[0].mxu0
    %v220 = vadd.f32 0.0, %v219
    %v221 = vpop.f32.mrb[0].mxu0
    %222 = vdwg.mxu0
    %v223 = vadd.f32 %v137, %v220
    %v224 = vtanh.pop %v223
    %v226 = vsel %vm149, %v224, 0
    %228 = vmatprep.subr.mxu0 0.0
    %229 = vmatpush1.msra.mxu0 %v145
    %230 = vmatprep.subr.mxu0 0.0
    %231 = vmatpush1.msra.mxu0 %v146
    %232 = vmatprep.subr.mxu0 0.0
    %233 = vmatpush1.msra.mxu0 %v147
    %234 = vmatprep.subr.mxu0 0.0
    %235 = vmatpush1.msra.mxu0 %v148
    %236 = vmatprep.subr.mxu0 0.0
    %237 = vmatpush1.msra.mxu0 0.0
    %238 = vmatprep.subr.mxu0 0.0
    %239 = vmatpush1.msra.mxu0 0.0
    %240 = vmatprep.subr.mxu0 0.0
    %241 = vmatpush1.msra.mxu0 0.0
    %242 = vmatprep.subr.mxu0 0.0
    %243 = vmatpush1.msra.mxu0 0.0
    %244 = vmatprep.subr.mxu0 0.0
    %245 = vmatpush1.msra.mxu0 0.0
    %246 = vmatprep.subr.mxu0 0.0
    %247 = vmatpush1.msra.mxu0 0.0
    %248 = vmatprep.subr.mxu0 0.0
    %249 = vmatpush1.msra.mxu0 0.0
    %250 = vmatprep.subr.mxu0 0.0
    %251 = vmatpush1.msra.mxu0 0.0
    %252 = vmatprep.subr.mxu0 0.0
    %253 = vmatpush1.msra.mxu0 0.0
    %254 = vmatprep.subr.mxu0 0.0
    %255 = vmatpush1.msra.mxu0 0.0
    %256 = vmatprep.subr.mxu0 0.0
    %257 = vmatpush1.msra.mxu0 0.0
    %258 = vmatprep.subr.mxu0 0.0
    %259 = vmatpush1.msra.mxu0 0.0
    %260 = vmatprep.subr.mxu0 0.0
    %261 = vmatpush1.msra.mxu0 0.0
    %262 = vmatprep.subr.mxu0 0.0
    %263 = vmatpush1.msra.mxu0 0.0
    %264 = vmatprep.subr.mxu0 0.0
    %265 = vmatpush1.msra.mxu0 0.0
    %266 = vmatprep.subr.mxu0 0.0
    %267 = vmatpush1.msra.mxu0 0.0
    %268 = vmatprep.subr.mxu0 0.0
    %269 = vmatpush1.msra.mxu0 0.0
    %270 = vmatprep.subr.mxu0 0.0
    %271 = vmatpush1.msra.mxu0 0.0
    %272 = vmatprep.subr.mxu0 0.0
    %273 = vmatpush1.msra.mxu0 0.0
    %274 = vmatprep.subr.mxu0 0.0
    %275 = vmatpush1.msra.mxu0 0.0
    %276 = vmatprep.subr.mxu0 0.0
    %277 = vmatpush1.msra.mxu0 0.0
    %278 = vmatprep.subr.mxu0 0.0
    %279 = vmatpush1.msra.mxu0 0.0
    %280 = vmatprep.subr.mxu0 0.0
    %281 = vmatpush1.msra.mxu0 0.0
    %282 = vmatprep.subr.mxu0 0.0
    %283 = vmatpush1.msra.mxu0 0.0
    %284 = vmatprep.subr.mxu0 0.0
    %285 = vmatpush1.msra.mxu0 0.0
    %286 = vmatprep.subr.mxu0 0.0
    %287 = vmatpush1.msra.mxu0 0.0
    %288 = vmatprep.subr.mxu0 0.0
    %289 = vmatpush1.msra.mxu0 0.0
    %290 = vmatprep.subr.mxu0 0.0
    %291 = vmatpush1.msra.mxu0 0.0
    %292 = vmatprep.mubr.f32.mxu0 0.0
    %293 = vmatmul.mubr.f32.gmra.mrb[0].mxu0 %v226
    %v294 = vpop.f32.mrb[0].mxu0
    %v295 = vadd.f32 0.0, %v294
    %v296 = vpop.f32.mrb[0].mxu0
    %297 = vdwg.mxu0
    %v299 = vrot.slane %v295, 6
    %v301 = vadd.f32 %v137, %v299
    %v302 = vtanh.pop %v301
    %v304 = vrot.slane %v302, 2
    %v305 = vsel %vm149, %v304, 0
    %307 = vmatprep.subr.mxu0 0.0
    %308 = vmatpush1.msra.mxu0 %v145
    %309 = vmatprep.subr.mxu0 0.0
    %310 = vmatpush1.msra.mxu0 %v146
    %311 = vmatprep.subr.mxu0 0.0
    %312 = vmatpush1.msra.mxu0 %v147
    %313 = vmatprep.subr.mxu0 0.0
    %314 = vmatpush1.msra.mxu0 %v148
    %315 = vmatprep.subr.mxu0 0.0
    %316 = vmatpush1.msra.mxu0 0.0
    %317 = vmatprep.subr.mxu0 0.0
    %318 = vmatpush1.msra.mxu0 0.0
    %319 = vmatprep.subr.mxu0 0.0
    %320 = vmatpush1.msra.mxu0 0.0
    %321 = vmatprep.subr.mxu0 0.0
    %322 = vmatpush1.msra.mxu0 0.0
    %323 = vmatprep.subr.mxu0 0.0
    %324 = vmatpush1.msra.mxu0 0.0
    %325 = vmatprep.subr.mxu0 0.0
    %326 = vmatpush1.msra.mxu0 0.0
    %327 = vmatprep.subr.mxu0 0.0
    %328 = vmatpush1.msra.mxu0 0.0
    %329 = vmatprep.subr.mxu0 0.0
    %330 = vmatpush1.msra.mxu0 0.0
    %331 = vmatprep.subr.mxu0 0.0
    %332 = vmatpush1.msra.mxu0 0.0
    %333 = vmatprep.subr.mxu0 0.0
    %334 = vmatpush1.msra.mxu0 0.0
    %335 = vmatprep.subr.mxu0 0.0
    %336 = vmatpush1.msra.mxu0 0.0
    %337 = vmatprep.subr.mxu0 0.0
    %338 = vmatpush1.msra.mxu0 0.0
    %339 = vmatprep.subr.mxu0 0.0
    %340 = vmatpush1.msra.mxu0 0.0
    %341 = vmatprep.subr.mxu0 0.0
    %342 = vmatpush1.msra.mxu0 0.0
    %343 = vmatprep.subr.mxu0 0.0
    %344 = vmatpush1.msra.mxu0 0.0
    %345 = vmatprep.subr.mxu0 0.0
    %346 = vmatpush1.msra.mxu0 0.0
    %347 = vmatprep.subr.mxu0 0.0
    %348 = vmatpush1.msra.mxu0 0.0
    %349 = vmatprep.subr.mxu0 0.0
    %350 = vmatpush1.msra.mxu0 0.0
    %351 = vmatprep.subr.mxu0 0.0
    %352 = vmatpush1.msra.mxu0 0.0
    %353 = vmatprep.subr.mxu0 0.0
    %354 = vmatpush1.msra.mxu0 0.0
    %355 = vmatprep.subr.mxu0 0.0
    %356 = vmatpush1.msra.mxu0 0.0
    %357 = vmatprep.subr.mxu0 0.0
    %358 = vmatpush1.msra.mxu0 0.0
    %359 = vmatprep.subr.mxu0 0.0
    %360 = vmatpush1.msra.mxu0 0.0
    %361 = vmatprep.subr.mxu0 0.0
    %362 = vmatpush1.msra.mxu0 0.0
    %363 = vmatprep.subr.mxu0 0.0
    %364 = vmatpush1.msra.mxu0 0.0
    %365 = vmatprep.subr.mxu0 0.0
    %366 = vmatpush1.msra.mxu0 0.0
    %367 = vmatprep.subr.mxu0 0.0
    %368 = vmatpush1.msra.mxu0 0.0
    %369 = vmatprep.subr.mxu0 0.0
    %370 = vmatpush1.msra.mxu0 0.0
    %371 = vmatprep.mubr.f32.mxu0 0.0
    %372 = vmatmul.mubr.f32.gmra.mrb[0].mxu0 %v305
    %v373 = vpop.f32.mrb[0].mxu0
    %v374 = vadd.f32 0.0, %v373
    %v375 = vpop.f32.mrb[0].mxu0
    %376 = vdwg.mxu0
    %v378 = vrot.slane %v374, 4
    %v380 = vadd.f32 %v137, %v378
    %v381 = vtanh.pop %v380
    %v383 = vrot.slane %v381, 4
    %v384 = vsel %vm149, %v383, 0
    %386 = vmatprep.subr.mxu0 0.0
    %387 = vmatpush1.msra.mxu0 %v145
    %388 = vmatprep.subr.mxu0 0.0
    %389 = vmatpush1.msra.mxu0 %v146
    %390 = vmatprep.subr.mxu0 0.0
    %391 = vmatpush1.msra.mxu0 %v147
    %392 = vmatprep.subr.mxu0 0.0
    %393 = vmatpush1.msra.mxu0 %v148
    %394 = vmatprep.subr.mxu0 0.0
    %395 = vmatpush1.msra.mxu0 0.0
    %396 = vmatprep.subr.mxu0 0.0
    %397 = vmatpush1.msra.mxu0 0.0
    %398 = vmatprep.subr.mxu0 0.0
    %399 = vmatpush1.msra.mxu0 0.0
    %400 = vmatprep.subr.mxu0 0.0
    %401 = vmatpush1.msra.mxu0 0.0
    %402 = vmatprep.subr.mxu0 0.0
    %403 = vmatpush1.msra.mxu0 0.0
    %404 = vmatprep.subr.mxu0 0.0
    %405 = vmatpush1.msra.mxu0 0.0
    %406 = vmatprep.subr.mxu0 0.0
    %407 = vmatpush1.msra.mxu0 0.0
    %408 = vmatprep.subr.mxu0 0.0
    %409 = vmatpush1.msra.mxu0 0.0
    %410 = vmatprep.subr.mxu0 0.0
    %411 = vmatpush1.msra.mxu0 0.0
    %412 = vmatprep.subr.mxu0 0.0
    %413 = vmatpush1.msra.mxu0 0.0
    %414 = vmatprep.subr.mxu0 0.0
    %415 = vmatpush1.msra.mxu0 0.0
    %416 = vmatprep.subr.mxu0 0.0
    %417 = vmatpush1.msra.mxu0 0.0
    %418 = vmatprep.subr.mxu0 0.0
    %419 = vmatpush1.msra.mxu0 0.0
    %420 = vmatprep.subr.mxu0 0.0
    %421 = vmatpush1.msra.mxu0 0.0
    %422 = vmatprep.subr.mxu0 0.0
    %423 = vmatpush1.msra.mxu0 0.0
    %424 = vmatprep.subr.mxu0 0.0
    %425 = vmatpush1.msra.mxu0 0.0
    %426 = vmatprep.subr.mxu0 0.0
    %427 = vmatpush1.msra.mxu0 0.0
    %428 = vmatprep.subr.mxu0 0.0
    %429 = vmatpush1.msra.mxu0 0.0
    %430 = vmatprep.subr.mxu0 0.0
    %431 = vmatpush1.msra.mxu0 0.0
    %432 = vmatprep.subr.mxu0 0.0
    %433 = vmatpush1.msra.mxu0 0.0
    %434 = vmatprep.subr.mxu0 0.0
    %435 = vmatpush1.msra.mxu0 0.0
    %436 = vmatprep.subr.mxu0 0.0
    %437 = vmatpush1.msra.mxu0 0.0
    %438 = vmatprep.subr.mxu0 0.0
    %439 = vmatpush1.msra.mxu0 0.0
    %440 = vmatprep.subr.mxu0 0.0
    %441 = vmatpush1.msra.mxu0 0.0
    %442 = vmatprep.subr.mxu0 0.0
    %443 = vmatpush1.msra.mxu0 0.0
    %444 = vmatprep.subr.mxu0 0.0
    %445 = vmatpush1.msra.mxu0 0.0
    %446 = vmatprep.subr.mxu0 0.0
    %447 = vmatpush1.msra.mxu0 0.0
    %448 = vmatprep.subr.mxu0 0.0
    %449 = vmatpush1.msra.mxu0 0.0
    %450 = vmatprep.mubr.f32.mxu0 0.0
    %451 = vmatmul.mubr.f32.gmra.mrb[0].mxu0 %v384
    %v452 = vpop.f32.mrb[0].mxu0
    %v453 = vadd.f32 0.0, %v452
    %v454 = vpop.f32.mrb[0].mxu0
    %455 = vdwg.mxu0
    %v457 = vrot.slane %v453, 2
    %v459 = vadd.f32 %v137, %v457
    %v460 = vtanh.pop %v459
    %v462 = vrot.slane %v460, 6
    %v463 = vsel %vm149, %v462, 0
    %465 = vmatprep.subr.mxu0 0.0
    %466 = vmatpush1.msra.mxu0 %v145
    %467 = vmatprep.subr.mxu0 0.0
    %468 = vmatpush1.msra.mxu0 %v146
    %469 = vmatprep.subr.mxu0 0.0
    %470 = vmatpush1.msra.mxu0 %v147
    %471 = vmatprep.subr.mxu0 0.0
    %472 = vmatpush1.msra.mxu0 %v148
    %473 = vmatprep.subr.mxu0 0.0
    %474 = vmatpush1.msra.mxu0 0.0
    %475 = vmatprep.subr.mxu0 0.0
    %476 = vmatpush1.msra.mxu0 0.0
    %477 = vmatprep.subr.mxu0 0.0
    %478 = vmatpush1.msra.mxu0 0.0
    %479 = vmatprep.subr.mxu0 0.0
    %480 = vmatpush1.msra.mxu0 0.0
    %481 = vmatprep.subr.mxu0 0.0
    %482 = vmatpush1.msra.mxu0 0.0
    %483 = vmatprep.subr.mxu0 0.0
    %484 = vmatpush1.msra.mxu0 0.0
    %485 = vmatprep.subr.mxu0 0.0
    %486 = vmatpush1.msra.mxu0 0.0
    %487 = vmatprep.subr.mxu0 0.0
    %488 = vmatpush1.msra.mxu0 0.0
    %489 = vmatprep.subr.mxu0 0.0
    %490 = vmatpush1.msra.mxu0 0.0
    %491 = vmatprep.subr.mxu0 0.0
    %492 = vmatpush1.msra.mxu0 0.0
    %493 = vmatprep.subr.mxu0 0.0
    %494 = vmatpush1.msra.mxu0 0.0
    %495 = vmatprep.subr.mxu0 0.0
    %496 = vmatpush1.msra.mxu0 0.0
    %497 = vmatprep.subr.mxu0 0.0
    %498 = vmatpush1.msra.mxu0 0.0
    %499 = vmatprep.subr.mxu0 0.0
    %500 = vmatpush1.msra.mxu0 0.0
    %501 = vmatprep.subr.mxu0 0.0
    %502 = vmatpush1.msra.mxu0 0.0
    %503 = vmatprep.subr.mxu0 0.0
    %504 = vmatpush1.msra.mxu0 0.0
    %505 = vmatprep.subr.mxu0 0.0
    %506 = vmatpush1.msra.mxu0 0.0
    %507 = vmatprep.subr.mxu0 0.0
    %508 = vmatpush1.msra.mxu0 0.0
    %509 = vmatprep.subr.mxu0 0.0
    %510 = vmatpush1.msra.mxu0 0.0
    %511 = vmatprep.subr.mxu0 0.0
    %512 = vmatpush1.msra.mxu0 0.0
    %513 = vmatprep.subr.mxu0 0.0
    %514 = vmatpush1.msra.mxu0 0.0
    %515 = vmatprep.subr.mxu0 0.0
    %516 = vmatpush1.msra.mxu0 0.0
    %517 = vmatprep.subr.mxu0 0.0
    %518 = vmatpush1.msra.mxu0 0.0
    %519 = vmatprep.subr.mxu0 0.0
    %520 = vmatpush1.msra.mxu0 0.0
    %521 = vmatprep.subr.mxu0 0.0
    %522 = vmatpush1.msra.mxu0 0.0
    %523 = vmatprep.subr.mxu0 0.0
    %524 = vmatpush1.msra.mxu0 0.0
    %525 = vmatprep.subr.mxu0 0.0
    %526 = vmatpush1.msra.mxu0 0.0
    %527 = vmatprep.subr.mxu0 0.0
    %528 = vmatpush1.msra.mxu0 0.0
    %529 = vmatprep.mubr.f32.mxu0 0.0
    %530 = vmatmul.mubr.f32.gmra.mrb[0].mxu0 %v463
    %v531 = vpop.f32.mrb[0].mxu0
    %v532 = vadd.f32 0.0, %v531
    %v533 = vpop.f32.mrb[0].mxu0
    %534 = vdwg.mxu0
    %v535 = vadd.f32 %v142, %v532
    %v536 = vtanh.pop %v535
    %v538 = vsel %vm149, %v536, 0
    %540 = vmatprep.subr.mxu0 0.0
    %541 = vmatpush1.msra.mxu0 %v145
    %542 = vmatprep.subr.mxu0 0.0
    %543 = vmatpush1.msra.mxu0 %v146
    %544 = vmatprep.subr.mxu0 0.0
    %545 = vmatpush1.msra.mxu0 %v147
    %546 = vmatprep.subr.mxu0 0.0
    %547 = vmatpush1.msra.mxu0 %v148
    %548 = vmatprep.subr.mxu0 0.0
    %549 = vmatpush1.msra.mxu0 0.0
    %550 = vmatprep.subr.mxu0 0.0
    %551 = vmatpush1.msra.mxu0 0.0
    %552 = vmatprep.subr.mxu0 0.0
    %553 = vmatpush1.msra.mxu0 0.0
    %554 = vmatprep.subr.mxu0 0.0
    %555 = vmatpush1.msra.mxu0 0.0
    %556 = vmatprep.subr.mxu0 0.0
    %557 = vmatpush1.msra.mxu0 0.0
    %558 = vmatprep.subr.mxu0 0.0
    %559 = vmatpush1.msra.mxu0 0.0
    %560 = vmatprep.subr.mxu0 0.0
    %561 = vmatpush1.msra.mxu0 0.0
    %562 = vmatprep.subr.mxu0 0.0
    %563 = vmatpush1.msra.mxu0 0.0
    %564 = vmatprep.subr.mxu0 0.0
    %565 = vmatpush1.msra.mxu0 0.0
    %566 = vmatprep.subr.mxu0 0.0
    %567 = vmatpush1.msra.mxu0 0.0
    %568 = vmatprep.subr.mxu0 0.0
    %569 = vmatpush1.msra.mxu0 0.0
    %570 = vmatprep.subr.mxu0 0.0
    %571 = vmatpush1.msra.mxu0 0.0
    %572 = vmatprep.subr.mxu0 0.0
    %573 = vmatpush1.msra.mxu0 0.0
    %574 = vmatprep.subr.mxu0 0.0
    %575 = vmatpush1.msra.mxu0 0.0
    %576 = vmatprep.subr.mxu0 0.0
    %577 = vmatpush1.msra.mxu0 0.0
    %578 = vmatprep.subr.mxu0 0.0
    %579 = vmatpush1.msra.mxu0 0.0
    %580 = vmatprep.subr.mxu0 0.0
    %581 = vmatpush1.msra.mxu0 0.0
    %582 = vmatprep.subr.mxu0 0.0
    %583 = vmatpush1.msra.mxu0 0.0
    %584 = vmatprep.subr.mxu0 0.0
    %585 = vmatpush1.msra.mxu0 0.0
    %586 = vmatprep.subr.mxu0 0.0
    %587 = vmatpush1.msra.mxu0 0.0
    %588 = vmatprep.subr.mxu0 0.0
    %589 = vmatpush1.msra.mxu0 0.0
    %590 = vmatprep.subr.mxu0 0.0
    %591 = vmatpush1.msra.mxu0 0.0
    %592 = vmatprep.subr.mxu0 0.0
    %593 = vmatpush1.msra.mxu0 0.0
    %594 = vmatprep.subr.mxu0 0.0
    %595 = vmatpush1.msra.mxu0 0.0
    %596 = vmatprep.subr.mxu0 0.0
    %597 = vmatpush1.msra.mxu0 0.0
    %598 = vmatprep.subr.mxu0 0.0
    %599 = vmatpush1.msra.mxu0 0.0
    %600 = vmatprep.subr.mxu0 0.0
    %601 = vmatpush1.msra.mxu0 0.0
    %602 = vmatprep.subr.mxu0 0.0
    %603 = vmatpush1.msra.mxu0 0.0
    %604 = vmatprep.mubr.f32.mxu0 0.0
    %605 = vmatmul.mubr.f32.gmra.mrb[0].mxu0 %v538
    %v606 = vpop.f32.mrb[0].mxu0
    %v607 = vadd.f32 0.0, %v606
    %v608 = vpop.f32.mrb[0].mxu0
    %609 = vdwg.mxu0
    %v611 = vrot.slane %v607, 6
    %v613 = vadd.f32 %v142, %v611
    %v614 = vtanh.pop %v613
    %v616 = vrot.slane %v614, 2
    %v617 = vsel %vm149, %v616, 0
    %619 = vmatprep.subr.mxu0 0.0
    %620 = vmatpush1.msra.mxu0 %v145
    %621 = vmatprep.subr.mxu0 0.0
    %622 = vmatpush1.msra.mxu0 %v146
    %623 = vmatprep.subr.mxu0 0.0
    %624 = vmatpush1.msra.mxu0 %v147
    %625 = vmatprep.subr.mxu0 0.0
    %626 = vmatpush1.msra.mxu0 %v148
    %627 = vmatprep.subr.mxu0 0.0
    %628 = vmatpush1.msra.mxu0 0.0
    %629 = vmatprep.subr.mxu0 0.0
    %630 = vmatpush1.msra.mxu0 0.0
    %631 = vmatprep.subr.mxu0 0.0
    %632 = vmatpush1.msra.mxu0 0.0
    %633 = vmatprep.subr.mxu0 0.0
    %634 = vmatpush1.msra.mxu0 0.0
    %635 = vmatprep.subr.mxu0 0.0
    %636 = vmatpush1.msra.mxu0 0.0
    %637 = vmatprep.subr.mxu0 0.0
    %638 = vmatpush1.msra.mxu0 0.0
    %639 = vmatprep.subr.mxu0 0.0
    %640 = vmatpush1.msra.mxu0 0.0
    %641 = vmatprep.subr.mxu0 0.0
    %642 = vmatpush1.msra.mxu0 0.0
    %643 = vmatprep.subr.mxu0 0.0
    %644 = vmatpush1.msra.mxu0 0.0
    %645 = vmatprep.subr.mxu0 0.0
    %646 = vmatpush1.msra.mxu0 0.0
    %647 = vmatprep.subr.mxu0 0.0
    %648 = vmatpush1.msra.mxu0 0.0
    %649 = vmatprep.subr.mxu0 0.0
    %650 = vmatpush1.msra.mxu0 0.0
    %651 = vmatprep.subr.mxu0 0.0
    %652 = vmatpush1.msra.mxu0 0.0
    %653 = vmatprep.subr.mxu0 0.0
    %654 = vmatpush1.msra.mxu0 0.0
    %655 = vmatprep.subr.mxu0 0.0
    %656 = vmatpush1.msra.mxu0 0.0
    %657 = vmatprep.subr.mxu0 0.0
    %658 = vmatpush1.msra.mxu0 0.0
    %659 = vmatprep.subr.mxu0 0.0
    %660 = vmatpush1.msra.mxu0 0.0
    %661 = vmatprep.subr.mxu0 0.0
    %662 = vmatpush1.msra.mxu0 0.0
    %663 = vmatprep.subr.mxu0 0.0
    %664 = vmatpush1.msra.mxu0 0.0
    %665 = vmatprep.subr.mxu0 0.0
    %666 = vmatpush1.msra.mxu0 0.0
    %667 = vmatprep.subr.mxu0 0.0
    %668 = vmatpush1.msra.mxu0 0.0
    %669 = vmatprep.subr.mxu0 0.0
    %670 = vmatpush1.msra.mxu0 0.0
    %671 = vmatprep.subr.mxu0 0.0
    %672 = vmatpush1.msra.mxu0 0.0
    %673 = vmatprep.subr.mxu0 0.0
    %674 = vmatpush1.msra.mxu0 0.0
    %675 = vmatprep.subr.mxu0 0.0
    %676 = vmatpush1.msra.mxu0 0.0
    %677 = vmatprep.subr.mxu0 0.0
    %678 = vmatpush1.msra.mxu0 0.0
    %679 = vmatprep.subr.mxu0 0.0
    %680 = vmatpush1.msra.mxu0 0.0
    %681 = vmatprep.subr.mxu0 0.0
    %682 = vmatpush1.msra.mxu0 0.0
    %683 = vmatprep.mubr.f32.mxu0 0.0
    %684 = vmatmul.mubr.f32.gmra.mrb[0].mxu0 %v617
    %v685 = vpop.f32.mrb[0].mxu0
    %v686 = vadd.f32 0.0, %v685
    %v687 = vpop.f32.mrb[0].mxu0
    %688 = vdwg.mxu0
    %v690 = vrot.slane %v686, 4
    %v692 = vadd.f32 %v142, %v690
    %v693 = vtanh.pop %v692
    %v695 = vrot.slane %v693, 4
    %v696 = vsel %vm149, %v695, 0
    %698 = vmatprep.subr.mxu0 0.0
    %699 = vmatpush1.msra.mxu0 %v145
    %700 = vmatprep.subr.mxu0 0.0
    %701 = vmatpush1.msra.mxu0 %v146
    %702 = vmatprep.subr.mxu0 0.0
    %703 = vmatpush1.msra.mxu0 %v147
    %704 = vmatprep.subr.mxu0 0.0
    %705 = vmatpush1.msra.mxu0 %v148
    %706 = vmatprep.subr.mxu0 0.0
    %707 = vmatpush1.msra.mxu0 0.0
    %708 = vmatprep.subr.mxu0 0.0
    %709 = vmatpush1.msra.mxu0 0.0
    %710 = vmatprep.subr.mxu0 0.0
    %711 = vmatpush1.msra.mxu0 0.0
    %712 = vmatprep.subr.mxu0 0.0
    %713 = vmatpush1.msra.mxu0 0.0
    %714 = vmatprep.subr.mxu0 0.0
    %715 = vmatpush1.msra.mxu0 0.0
    %716 = vmatprep.subr.mxu0 0.0
    %717 = vmatpush1.msra.mxu0 0.0
    %718 = vmatprep.subr.mxu0 0.0
    %719 = vmatpush1.msra.mxu0 0.0
    %720 = vmatprep.subr.mxu0 0.0
    %721 = vmatpush1.msra.mxu0 0.0
    %722 = vmatprep.subr.mxu0 0.0
    %723 = vmatpush1.msra.mxu0 0.0
    %724 = vmatprep.subr.mxu0 0.0
    %725 = vmatpush1.msra.mxu0 0.0
    %726 = vmatprep.subr.mxu0 0.0
    %727 = vmatpush1.msra.mxu0 0.0
    %728 = vmatprep.subr.mxu0 0.0
    %729 = vmatpush1.msra.mxu0 0.0
    %730 = vmatprep.subr.mxu0 0.0
    %731 = vmatpush1.msra.mxu0 0.0
    %732 = vmatprep.subr.mxu0 0.0
    %733 = vmatpush1.msra.mxu0 0.0
    %734 = vmatprep.subr.mxu0 0.0
    %735 = vmatpush1.msra.mxu0 0.0
    %736 = vmatprep.subr.mxu0 0.0
    %737 = vmatpush1.msra.mxu0 0.0
    %738 = vmatprep.subr.mxu0 0.0
    %739 = vmatpush1.msra.mxu0 0.0
    %740 = vmatprep.subr.mxu0 0.0
    %741 = vmatpush1.msra.mxu0 0.0
    %742 = vmatprep.subr.mxu0 0.0
    %743 = vmatpush1.msra.mxu0 0.0
    %744 = vmatprep.subr.mxu0 0.0
    %745 = vmatpush1.msra.mxu0 0.0
    %746 = vmatprep.subr.mxu0 0.0
    %747 = vmatpush1.msra.mxu0 0.0
    %748 = vmatprep.subr.mxu0 0.0
    %749 = vmatpush1.msra.mxu0 0.0
    %750 = vmatprep.subr.mxu0 0.0
    %751 = vmatpush1.msra.mxu0 0.0
    %752 = vmatprep.subr.mxu0 0.0
    %753 = vmatpush1.msra.mxu0 0.0
    %754 = vmatprep.subr.mxu0 0.0
    %755 = vmatpush1.msra.mxu0 0.0
    %756 = vmatprep.subr.mxu0 0.0
    %757 = vmatpush1.msra.mxu0 0.0
    %758 = vmatprep.subr.mxu0 0.0
    %759 = vmatpush1.msra.mxu0 0.0
    %760 = vmatprep.subr.mxu0 0.0
    %761 = vmatpush1.msra.mxu0 0.0
    %762 = vmatprep.mubr.f32.mxu0 0.0
    %763 = vmatmul.mubr.f32.gmra.mrb[0].mxu0 %v696
    %v764 = vpop.f32.mrb[0].mxu0
    %v765 = vadd.f32 0.0, %v764
    %v766 = vpop.f32.mrb[0].mxu0
    %767 = vdwg.mxu0
    %v769 = vrot.slane %v765, 2
    %v771 = vadd.f32 %v142, %v769
    %v772 = vtanh.pop %v771
    %v773 = vld [vmem:[%s4] sm:$0xff]
    %v774 = vld [vmem:[%s4 + $0x8] sm:$0xff]
    %v775 = vld [vmem:[%s4 + $0x10] sm:$0xff]
    %v776 = vld [vmem:[%s4 + $0x18] sm:$0xff]
    %v777 = vld [vmem:[%s5] sm:$0x1]
    %v779 = vlaneseq
    %v780 = vshrl.u32 %v779, 7
    %v781 = vsub.s32 0, %v780
    %v782 = vrot.slane %v777, %v781
    %v785 = vrot.slane %v772, 6
    %v786 = vsel %vm149, %v785, 0
    %788 = vmatprep.subr.mxu0 0.0
    %789 = vmatpush1.msra.mxu0 %v773
    %790 = vmatprep.subr.mxu0 0.0
    %791 = vmatpush1.msra.mxu0 %v774
    %792 = vmatprep.subr.mxu0 0.0
    %793 = vmatpush1.msra.mxu0 %v775
    %794 = vmatprep.subr.mxu0 0.0
    %795 = vmatpush1.msra.mxu0 %v776
    %796 = vmatprep.subr.mxu0 0.0
    %797 = vmatpush1.msra.mxu0 0.0
    %798 = vmatprep.subr.mxu0 0.0
    %799 = vmatpush1.msra.mxu0 0.0
    %800 = vmatprep.subr.mxu0 0.0
    %801 = vmatpush1.msra.mxu0 0.0
    %802 = vmatprep.subr.mxu0 0.0
    %803 = vmatpush1.msra.mxu0 0.0
    %804 = vmatprep.subr.mxu0 0.0
    %805 = vmatpush1.msra.mxu0 0.0
    %806 = vmatprep.subr.mxu0 0.0
    %807 = vmatpush1.msra.mxu0 0.0
    %808 = vmatprep.subr.mxu0 0.0
    %809 = vmatpush1.msra.mxu0 0.0
    %810 = vmatprep.subr.mxu0 0.0
    %811 = vmatpush1.msra.mxu0 0.0
    %812 = vmatprep.subr.mxu0 0.0
    %813 = vmatpush1.msra.mxu0 0.0
    %814 = vmatprep.subr.mxu0 0.0
    %815 = vmatpush1.msra.mxu0 0.0
    %816 = vmatprep.subr.mxu0 0.0
    %817 = vmatpush1.msra.mxu0 0.0
    %818 = vmatprep.subr.mxu0 0.0
    %819 = vmatpush1.msra.mxu0 0.0
    %820 = vmatprep.subr.mxu0 0.0
    %821 = vmatpush1.msra.mxu0 0.0
    %822 = vmatprep.subr.mxu0 0.0
    %823 = vmatpush1.msra.mxu0 0.0
    %824 = vmatprep.subr.mxu0 0.0
    %825 = vmatpush1.msra.mxu0 0.0
    %826 = vmatprep.subr.mxu0 0.0
    %827 = vmatpush1.msra.mxu0 0.0
    %828 = vmatprep.subr.mxu0 0.0
    %829 = vmatpush1.msra.mxu0 0.0
    %830 = vmatprep.subr.mxu0 0.0
    %831 = vmatpush1.msra.mxu0 0.0
    %832 = vmatprep.subr.mxu0 0.0
    %833 = vmatpush1.msra.mxu0 0.0
    %834 = vmatprep.subr.mxu0 0.0
    %835 = vmatpush1.msra.mxu0 0.0
    %836 = vmatprep.subr.mxu0 0.0
    %837 = vmatpush1.msra.mxu0 0.0
    %838 = vmatprep.subr.mxu0 0.0
    %839 = vmatpush1.msra.mxu0 0.0
    %840 = vmatprep.subr.mxu0 0.0
    %841 = vmatpush1.msra.mxu0 0.0
    %842 = vmatprep.subr.mxu0 0.0
    %843 = vmatpush1.msra.mxu0 0.0
    %844 = vmatprep.subr.mxu0 0.0
    %845 = vmatpush1.msra.mxu0 0.0
    %846 = vmatprep.subr.mxu0 0.0
    %847 = vmatpush1.msra.mxu0 0.0
    %848 = vmatprep.subr.mxu0 0.0
    %849 = vmatpush1.msra.mxu0 0.0
    %850 = vmatprep.subr.mxu0 0.0
    %851 = vmatpush1.msra.mxu0 0.0
    %852 = vmatprep.mubr.f32.mxu0 0.0
    %853 = vmatmul.mubr.f32.gmra.mrb[0].mxu0 %v786
    %v854 = vpop.f32.mrb[0].mxu0
    %v855 = vadd.f32 %v782, %v854
    %v856 = vpop.f32.mrb[0].mxu0
    %857 = vdwg.mxu0
    %vm858 = vcmask 58368
    %859 = vst.msk [vmem:[#allocation7] sm:$0x3] %vm858, %v855
    // Predicated region
    $region34: #{tpu_custom_call.1} parent=1 // pred_check
      _
    $region35: #{tpu_custom_call.1} parent=1 // pred_check_branch
      %861 = sbr.rel (0) target = $region37
    $region36: #{tpu_custom_call.1} parent=1 // pred_region
      %s863 = ssub.s32 32, 32
      %864 = vsyncadd [#allocation4], %s863
      %s866 = sshll.u32 [#allocation7], 4
      %s867 = int_to_ptr.vmem [resolvable:$true] %s866
      %869 = dma.vmem_to_hbm [thread:$0]  %s867, 32, %s6, [#allocation4]
    $region37: #{tpu_custom_call.1} parent=1 // pred_fallthru
      _
    // Predicated region
    $region38: #{tpu_custom_call.1} parent=1 // pred_check
      _
    $region39: #{tpu_custom_call.1} parent=1 // pred_check_branch
      %871 = sbr.rel (0) target = $region41
    $region40: #{tpu_custom_call.1} parent=1 // pred_region
      %872 = dma.done [#allocation4], 32
    $region41: #{tpu_custom_call.1} parent=1 // pred_fallthru
      _
    %873 = vsyncpa [#allocation3], 1
    %874 = vsyncpa [#allocation6], 1
    %875 = vsyncpa [#allocation4], 1

</llo_original>
